<compile_context>
chip_gen: v7x
topology: tpu7x:2x2x1
jax: 0.10.0
libtpu: 0.0.40
codegen_flags: <defaults>
</compile_context>

<pallas_src>
import jax
import jax.numpy as jnp
from jax.experimental import pallas as pl
from jax.experimental.pallas import tpu as pltpu

H1 = 32   # conv output channels
H2 = 16   # hidden Linear width


def _round_up(n, m):
    return ((n + m - 1) // m) * m


def dqn_kernel(x_ref, w1_ref, b1_ref, w2_ref, b2_ref, w3t_ref, b3t_ref, out_ref):
    # Conv2d(state_dim, 32, 5x5, stride 1) on a 5x5 input == dense matmul; Tanh.
    h1 = jnp.tanh(
        jnp.dot(x_ref[...], w1_ref[...], preferred_element_type=jnp.float32)
        + b1_ref[...]
    )
    # TODO(synk): Dropout(0.2) is identity at inference time; training-mode
    # stochastic mask is not implemented.
    h2 = jnp.maximum(
        jnp.dot(h1, w2_ref[...], preferred_element_type=jnp.float32)
        + b2_ref[...],
        0.0,
    )
    # Final Linear computed transposed: out_t[a, b] = sum_k w3t[a, k] * h2[b, k].
    # The (A, TB) output block is lane-dense along the batch axis, so the store
    # is unmasked and output DMA is ~16x smaller than a 128-lane-padded block.
    out_t = jax.lax.dot_general(
        w3t_ref[...], h2,
        dimension_numbers=(((1,), (1,)), ((), ())),
        preferred_element_type=jnp.float32,
    )
    out_ref[...] = out_t + b3t_ref[...]


def dqn_forward(x, params, *, block_b=4096):
    """x: (B, state_dim*25) [preferred] or (B, state_dim, 5, 5) -> (B, action_dim)."""
    w1, b1, w2, b2, w3, b3 = params
    if x.ndim == 4:
        # Prefer storing replay states pre-flattened; flattening here is only a
        # fallback (it may trigger an NCHW relayout pass before the kernel).
        x = x.reshape(x.shape[0], -1)
    B, K = x.shape
    A = w3.shape[1]

    # Batch tile selection:
    #   * large enough to amortize the ~0.35 us fixed per-grid-step overhead,
    #   * >=2 grid steps for mid/large batches so ("parallel",) shards the
    #     batch across both v7x TensorCores,
    #   * small batches (<256) use one full-extent block (no alignment rules
    #     triggered, no host-side padding ever materialized).
    if B >= 256:
        TB = min(block_b, _round_up(pl.cdiv(B, 2), 128))
    else:
        TB = B
    grid = (pl.cdiv(B, TB),)
    n_steps = grid[0]

    # Weights are tiny (one-time DMA, VMEM-resident).  Cast the first-layer
    # weight to the activation dtype (bf16 states -> bf16 MXU feed, f32 acc).
    w1c = w1.astype(x.dtype)
    b1f = b1.astype(jnp.float32).reshape(1, H1)
    w2f = w2.astype(jnp.float32)
    b2f = b2.astype(jnp.float32).reshape(1, H2)
    w3t = w3.astype(jnp.float32).T            # (A, H2): last matmul done transposed
    b3t = b3.astype(jnp.float32).reshape(A, 1)

    weight_bytes = 4 * (K * H1 + H1 + H1 * H2 + H2 + A * H2 + A)
    flops = 2 * B * (K * H1 + H1 * H2 + H2 * A)
    bytes_accessed = (
        x.dtype.itemsize * B * K          # activation stream (dominant)
        + 4 * A * n_steps * TB            # lane-dense transposed output
        + weight_bytes                    # one-time weights/biases
    )
    cost = pl.CostEstimate(
        flops=flops, transcendentals=B * H1, bytes_accessed=bytes_accessed
    )

    # VMEM budget: double-buffered x/out blocks + resident weights + slack.
    block_bytes = TB * (K * x.dtype.itemsize + A * 4)
    vmem_limit = int(min(48 << 20, max(8 << 20,
                                       2 * block_bytes + 2 * weight_bytes + (4 << 20))))

    out_t = pl.pallas_call(
        dqn_kernel,
        out_shape=jax.ShapeDtypeStruct((A, n_steps * TB), jnp.float32),
        grid=grid,
        in_specs=[
            # activations: blocked along batch; K block dim == full array dim
            pl.BlockSpec((TB, K), lambda i: (i, 0)),
            # weights / biases: constant index maps -> fetched once, VMEM-resident
            pl.BlockSpec((K, H1), lambda i: (0, 0)),
            pl.BlockSpec((1, H1), lambda i: (0, 0)),
            pl.BlockSpec((H1, H2), lambda i: (0, 0)),
            pl.BlockSpec((1, H2), lambda i: (0, 0)),
            pl.BlockSpec((A, H2), lambda i: (0, 0)),
            pl.BlockSpec((A, 1), lambda i: (0, 0)),
        ],
        out_specs=pl.BlockSpec((A, TB), lambda i: (0, i)),
        compiler_params=pltpu.CompilerParams(
            dimension_semantics=("parallel",),
            vmem_limit_bytes=vmem_limit,
        ),
        cost_estimate=cost,
    )(x, w1c, b1f, w2f, b2f, w3t, b3t)

    # (A, n_steps*TB) -> (B, A): ~32 B/sample, negligible vs. the input stream.
    return out_t[:, :B].T


def init_params(key, state_dim, action_dim):
    """Deterministic synthetic parameters matching the PyTorch module shapes."""
    ks = jax.random.split(key, 6)
    k_in = state_dim * 5 * 5
    # Conv weight (32, state_dim, 5, 5) -> flattened matmul weight (C*25, 32).
    w_conv = jax.random.uniform(ks[0], (32, state_dim, 5, 5), jnp.float32, -0.1, 0.1)
    w1 = w_conv.reshape(32, k_in).T
    b1 = jax.random.uniform(ks[1], (32,), jnp.float32, -0.1, 0.1)
    w2 = jax.random.uniform(ks[2], (32, 16), jnp.float32, -0.1, 0.1)
    b2 = jax.random.uniform(ks[3], (16,), jnp.float32, -0.1, 0.1)
    w3 = jax.random.uniform(ks[4], (16, action_dim), jnp.float32, -0.1, 0.1)
    b3 = jax.random.uniform(ks[5], (action_dim,), jnp.float32, -0.1, 0.1)
    return (w1, b1, w2, b2, w3, b3)


def dqn_reference(x, params):
    """Pure-JAX reference of the same forward pass (eval-mode dropout)."""
    w1, b1, w2, b2, w3, b3 = params
    if x.ndim == 4:
        x = x.reshape(x.shape[0], -1)
    h1 = jnp.tanh(x.astype(jnp.float32) @ w1 + b1.reshape(1, -1))
    h2 = jnp.maximum(h1 @ w2 + b2.reshape(1, -1), 0.0)
    return h2 @ w3 + b3.reshape(1, -1)


if __name__ == "__main__":
    state_dim = 4
    action_dim = 6

    key = jax.random.PRNGKey(0)
    k_x, k_p, k_x2 = jax.random.split(key, 3)
    params = init_params(k_p, state_dim, action_dim)

    # Small batch: input must be 5x5 spatial for Flatten -> Linear(32, 16).
    # Replay buffers should store states pre-flattened; flatten once here.
    x = jax.random.normal(k_x, (2, state_dim, 5, 5), jnp.float32)
    x_flat = x.reshape(2, -1)
    out = jax.block_until_ready(dqn_forward(x_flat, params))
    ref = dqn_reference(x_flat, params)
    assert out.shape == (2, action_dim)
    assert jnp.allclose(out, ref, atol=1e-5, rtol=1e-5)

    # Mid batch: 2 grid steps (megacore split) + ragged final batch block.
    x_big = jax.random.normal(k_x2, (300, state_dim * 25), jnp.float32)
    out_big = jax.block_until_ready(dqn_forward(x_big, params))
    ref_big = dqn_reference(x_big, params)
    assert out_big.shape == (300, action_dim)
    assert jnp.allclose(out_big, ref_big, atol=1e-4, rtol=1e-4)

    # Smaller tile -> more grid steps, exercises the pipelined multi-step path.
    out_small_tb = jax.block_until_ready(dqn_forward(x_big, params, block_b=128))
    assert jnp.allclose(out_small_tb, ref_big, atol=1e-4, rtol=1e-4)

    print("KERNEL_OK")
</pallas_src>

<mosaic_0001>
module attributes {stable_mosaic.version = 11 : i64} {
  func.func @dqn_kernel(%arg0: i32, %arg1: memref<2x100xf32, #tpu.memory_space<vmem>>, %arg2: memref<100x32xf32, #tpu.memory_space<vmem>>, %arg3: memref<1x32xf32, #tpu.memory_space<vmem>>, %arg4: memref<32x16xf32, #tpu.memory_space<vmem>>, %arg5: memref<1x16xf32, #tpu.memory_space<vmem>>, %arg6: memref<6x16xf32, #tpu.memory_space<vmem>>, %arg7: memref<6x1xf32, #tpu.memory_space<vmem>>, %arg8: memref<6x2xf32, #tpu.memory_space<vmem>>) attributes {dimension_semantics = [#tpu.dimension_semantics<parallel>], iteration_bounds = array<i64: 1>, scalar_prefetch = 0 : i64, scratch_operands = 0 : i64, tpu.core_type = #tpu.core_type<tc>, window_params = [{transform_indices = @transform_0, window_bounds = array<i64: 2, 100>}, {pipeline_mode = #tpu.pipeline_mode<synchronous>, transform_indices = @transform_1, window_bounds = array<i64: 100, 32>}, {pipeline_mode = #tpu.pipeline_mode<synchronous>, transform_indices = @transform_2, window_bounds = array<i64: 1, 32>}, {pipeline_mode = #tpu.pipeline_mode<synchronous>, transform_indices = @transform_3, window_bounds = array<i64: 32, 16>}, {pipeline_mode = #tpu.pipeline_mode<synchronous>, transform_indices = @transform_4, window_bounds = array<i64: 1, 16>}, {pipeline_mode = #tpu.pipeline_mode<synchronous>, transform_indices = @transform_5, window_bounds = array<i64: 6, 16>}, {pipeline_mode = #tpu.pipeline_mode<synchronous>, transform_indices = @transform_6, window_bounds = array<i64: 6, 1>}, {transform_indices = @transform_7, window_bounds = array<i64: 6, 2>}]} {
    %c0 = arith.constant 0 : index
    %c0_0 = arith.constant 0 : index
    %0 = vector.load %arg1[%c0, %c0_0] : memref<2x100xf32, #tpu.memory_space<vmem>>, vector<2x100xf32>
    %c0_1 = arith.constant 0 : index
    %c0_2 = arith.constant 0 : index
    %1 = vector.load %arg2[%c0_1, %c0_2] : memref<100x32xf32, #tpu.memory_space<vmem>>, vector<100x32xf32>
    %cst = arith.constant dense<0.000000e+00> : vector<2x32xf32>
    %2 = tpu.matmul %0, %1, %cst {dimension_numbers = #tpu.dot_dimension_numbers<[1], [0], [0], [1], [0, 0, 1, 1], [], []>} : vector<2x100xf32>, vector<100x32xf32>, vector<2x32xf32> -> vector<2x32xf32>
    %c0_3 = arith.constant 0 : index
    %c0_4 = arith.constant 0 : index
    %3 = vector.load %arg3[%c0_3, %c0_4] : memref<1x32xf32, #tpu.memory_space<vmem>>, vector<1x32xf32>
    %4 = vector.broadcast %3 : vector<1x32xf32> to vector<2x32xf32>
    %5 = arith.addf %2, %4 : vector<2x32xf32>
    %6 = math.tanh %5 : vector<2x32xf32>
    %c0_5 = arith.constant 0 : index
    %c0_6 = arith.constant 0 : index
    %7 = vector.load %arg4[%c0_5, %c0_6] : memref<32x16xf32, #tpu.memory_space<vmem>>, vector<32x16xf32>
    %cst_7 = arith.constant dense<0.000000e+00> : vector<2x16xf32>
    %8 = tpu.matmul %6, %7, %cst_7 {dimension_numbers = #tpu.dot_dimension_numbers<[1], [0], [0], [1], [0, 0, 1, 1], [], []>} : vector<2x32xf32>, vector<32x16xf32>, vector<2x16xf32> -> vector<2x16xf32>
    %c0_8 = arith.constant 0 : index
    %c0_9 = arith.constant 0 : index
    %9 = vector.load %arg5[%c0_8, %c0_9] : memref<1x16xf32, #tpu.memory_space<vmem>>, vector<1x16xf32>
    %10 = vector.broadcast %9 : vector<1x16xf32> to vector<2x16xf32>
    %11 = arith.addf %8, %10 : vector<2x16xf32>
    %cst_10 = arith.constant 0.000000e+00 : f32
    %12 = vector.broadcast %cst_10 : f32 to vector<2x16xf32>
    %13 = arith.maximumf %11, %12 : vector<2x16xf32>
    %c0_11 = arith.constant 0 : index
    %c0_12 = arith.constant 0 : index
    %14 = vector.load %arg6[%c0_11, %c0_12] : memref<6x16xf32, #tpu.memory_space<vmem>>, vector<6x16xf32>
    %cst_13 = arith.constant dense<0.000000e+00> : vector<6x2xf32>
    %15 = tpu.matmul %14, %13, %cst_13 {dimension_numbers = #tpu.dot_dimension_numbers<[1], [1], [0], [0], [0, 0, 1, 0], [], []>} : vector<6x16xf32>, vector<2x16xf32>, vector<6x2xf32> -> vector<6x2xf32>
    %c0_14 = arith.constant 0 : index
    %c0_15 = arith.constant 0 : index
    %16 = vector.load %arg7[%c0_14, %c0_15] : memref<6x1xf32, #tpu.memory_space<vmem>>, vector<6x1xf32>
    %17 = vector.broadcast %16 : vector<6x1xf32> to vector<6x2xf32>
    %18 = arith.addf %15, %17 : vector<6x2xf32>
    %c0_16 = arith.constant 0 : index
    %c0_17 = arith.constant 0 : index
    %19 = vector.load %arg8[%c0_16, %c0_17] : memref<6x2xf32, #tpu.memory_space<vmem>>, vector<6x2xf32>
    tpu.vector_store %arg8[%c0_16, %c0_17], %18 {strides = array<i32>} : memref<6x2xf32, #tpu.memory_space<vmem>>, vector<6x2xf32>,
    return
  }
  func.func @transform_0(%arg0: i32) -> (i32, i32) {
    %c0_i32 = arith.constant 0 : i32
    %c0_i32_0 = arith.constant 0 : i32
    return %arg0, %c0_i32 : i32, i32
  }
  func.func @transform_1(%arg0: i32) -> (i32, i32) {
    %c0_i32 = arith.constant 0 : i32
    %c0_i32_0 = arith.constant 0 : i32
    %c0_i32_1 = arith.constant 0 : i32
    return %c0_i32, %c0_i32_0 : i32, i32
  }
  func.func @transform_2(%arg0: i32) -> (i32, i32) {
    %c0_i32 = arith.constant 0 : i32
    %c0_i32_0 = arith.constant 0 : i32
    %c0_i32_1 = arith.constant 0 : i32
    return %c0_i32, %c0_i32_0 : i32, i32
  }
  func.func @transform_3(%arg0: i32) -> (i32, i32) {
    %c0_i32 = arith.constant 0 : i32
    %c0_i32_0 = arith.constant 0 : i32
    %c0_i32_1 = arith.constant 0 : i32
    return %c0_i32, %c0_i32_0 : i32, i32
  }
  func.func @transform_4(%arg0: i32) -> (i32, i32) {
    %c0_i32 = arith.constant 0 : i32
    %c0_i32_0 = arith.constant 0 : i32
    %c0_i32_1 = arith.constant 0 : i32
    return %c0_i32, %c0_i32_0 : i32, i32
  }
  func.func @transform_5(%arg0: i32) -> (i32, i32) {
    %c0_i32 = arith.constant 0 : i32
    %c0_i32_0 = arith.constant 0 : i32
    %c0_i32_1 = arith.constant 0 : i32
    return %c0_i32, %c0_i32_0 : i32, i32
  }
  func.func @transform_6(%arg0: i32) -> (i32, i32) {
    %c0_i32 = arith.constant 0 : i32
    %c0_i32_0 = arith.constant 0 : i32
    %c0_i32_1 = arith.constant 0 : i32
    return %c0_i32, %c0_i32_0 : i32, i32
  }
  func.func @transform_7(%arg0: i32) -> (i32, i32) {
    %c0_i32 = arith.constant 0 : i32
    %c0_i32_0 = arith.constant 0 : i32
    return %c0_i32, %arg0 : i32, i32
  }
}

</mosaic_0001>

<llo_original>
// kernel: tpu_custom_call.1
$region0: #{tpu_custom_call.1}
  #allocation0 [shape = 'u32[]', space=smem, size = 0x4, offset = 0x4, fixed_abs, tag = 'smem constant byte address 0x4 - core index']
  #allocation1 [shape = 'u32[144,128]{1,0:T(1,128)}', space=vmem, size = 0x12000, scoped, tag = 'internal scratch']
  %s0 = inlined_call_operand.vmem [shape: f32[2,100], index: 0, kind: input, shape index: {}]
  %s1 = inlined_call_operand.vmem [shape: f32[100,32], index: 1, kind: input, shape index: {}]
  %s2 = inlined_call_operand.vmem [shape: f32[1,32], index: 2, kind: input, shape index: {}]
  %s3 = inlined_call_operand.vmem [shape: f32[32,16], index: 3, kind: input, shape index: {}]
  %s4 = inlined_call_operand.vmem [shape: f32[1,16], index: 4, kind: input, shape index: {}]
  %s5 = inlined_call_operand.vmem [shape: f32[6,16], index: 5, kind: input, shape index: {}]
  %s6 = inlined_call_operand.vmem [shape: f32[6,1], index: 6, kind: input, shape index: {}]
  %s7 = inlined_call_operand.vmem [shape: f32[6,2], index: 7, kind: output, shape index: {}]
  %s8 = sld [smem:[#allocation0]]
  $region38: #{tpu_custom_call.1} parent=0
    _
  %s10 = ssub.s32 1, %s8
  %s11 = scalar_select 0, %s10, %s8
  // Predicated region
  $region2: #{tpu_custom_call.1} parent=0 // pred_check
    _
  $region3: #{tpu_custom_call.1} parent=0 // pred_check_branch
    %13 = sbr.rel (0) target = $region5
  $region4: #{tpu_custom_call.1} parent=0 // pred_region
    _
  $region5: #{tpu_custom_call.1} parent=0 // pred_fallthru
    _
  // Predicated region
  $region6: #{tpu_custom_call.1} parent=0 // pred_check
    _
  $region7: #{tpu_custom_call.1} parent=0 // pred_check_branch
    %15 = sbr.rel (0) target = $region9
  $region8: #{tpu_custom_call.1} parent=0 // pred_region
    _
  $region9: #{tpu_custom_call.1} parent=0 // pred_fallthru
    _
  // Predicated region
  $region10: #{tpu_custom_call.1} parent=0 // pred_check
    _
  $region11: #{tpu_custom_call.1} parent=0 // pred_check_branch
    %17 = sbr.rel (0) target = $region13
  $region12: #{tpu_custom_call.1} parent=0 // pred_region
    _
  $region13: #{tpu_custom_call.1} parent=0 // pred_fallthru
    _
  // Predicated region
  $region14: #{tpu_custom_call.1} parent=0 // pred_check
    _
  $region15: #{tpu_custom_call.1} parent=0 // pred_check_branch
    %19 = sbr.rel (0) target = $region17
  $region16: #{tpu_custom_call.1} parent=0 // pred_region
    _
  $region17: #{tpu_custom_call.1} parent=0 // pred_fallthru
    _
  // Predicated region
  $region18: #{tpu_custom_call.1} parent=0 // pred_check
    _
  $region19: #{tpu_custom_call.1} parent=0 // pred_check_branch
    %21 = sbr.rel (0) target = $region21
  $region20: #{tpu_custom_call.1} parent=0 // pred_region
    _
  $region21: #{tpu_custom_call.1} parent=0 // pred_fallthru
    _
  // Predicated region
  $region22: #{tpu_custom_call.1} parent=0 // pred_check
    _
  $region23: #{tpu_custom_call.1} parent=0 // pred_check_branch
    %23 = sbr.rel (0) target = $region25
  $region24: #{tpu_custom_call.1} parent=0 // pred_region
    _
  $region25: #{tpu_custom_call.1} parent=0 // pred_fallthru
    _
  // Predicated region
  $region26: #{tpu_custom_call.1} parent=0 // pred_check
    _
  $region27: #{tpu_custom_call.1} parent=0 // pred_check_branch
    %25 = sbr.rel (0) target = $region29
  $region28: #{tpu_custom_call.1} parent=0 // pred_region
    _
  $region29: #{tpu_custom_call.1} parent=0 // pred_fallthru
    _
  %v26 = vld [vmem:[%s0] sm:$0x3]
  %v27 = vld [vmem:[%s1] sm:$0xff]
  %v28 = vld [vmem:[%s1 + $0x8] sm:$0xff]
  %v29 = vld [vmem:[%s1 + $0x10] sm:$0xff]
  %v30 = vld [vmem:[%s1 + $0x18] sm:$0xff]
  %v31 = vld [vmem:[%s1 + $0x20] sm:$0xff]
  %v32 = vld [vmem:[%s1 + $0x28] sm:$0xff]
  %v33 = vld [vmem:[%s1 + $0x30] sm:$0xff]
  %v34 = vld [vmem:[%s1 + $0x38] sm:$0xff]
  %v35 = vld [vmem:[%s1 + $0x40] sm:$0xff]
  %v36 = vld [vmem:[%s1 + $0x48] sm:$0xff]
  %v37 = vld [vmem:[%s1 + $0x50] sm:$0xff]
  %v38 = vld [vmem:[%s1 + $0x58] sm:$0xff]
  %v39 = vld [vmem:[%s1 + $0x60] sm:$0xf]
  %v40 = vld [vmem:[%s2] sm:$0x1]
  %v42 = vlaneseq
  %v43 = vshrl.u32 %v42, 7
  %v44 = vsub.s32 0, %v43
  %v45 = vrot.slane %v40, %v44
  %vm47 = vcmask 818176
  %v49 = vsel %vm47, %v26, 0
  %vm51 = vcmask 1043456
  %v53 = vsel %vm51, %v39, 0
  %55 = vmatprep.subr.mxu0 0.0
  %56 = vmatpush1.msra.mxu0 %v27
  %57 = vmatprep.subr.mxu0 0.0
  %58 = vmatpush1.msra.mxu0 %v28
  %59 = vmatprep.subr.mxu0 0.0
  %60 = vmatpush1.msra.mxu0 %v29
  %61 = vmatprep.subr.mxu0 0.0
  %62 = vmatpush1.msra.mxu0 %v30
  %63 = vmatprep.subr.mxu0 0.0
  %64 = vmatpush1.msra.mxu0 %v31
  %65 = vmatprep.subr.mxu0 0.0
  %66 = vmatpush1.msra.mxu0 %v32
  %67 = vmatprep.subr.mxu0 0.0
  %68 = vmatpush1.msra.mxu0 %v33
  %69 = vmatprep.subr.mxu0 0.0
  %70 = vmatpush1.msra.mxu0 %v34
  %71 = vmatprep.subr.mxu0 0.0
  %72 = vmatpush1.msra.mxu0 %v35
  %73 = vmatprep.subr.mxu0 0.0
  %74 = vmatpush1.msra.mxu0 %v36
  %75 = vmatprep.subr.mxu0 0.0
  %76 = vmatpush1.msra.mxu0 %v37
  %77 = vmatprep.subr.mxu0 0.0
  %78 = vmatpush1.msra.mxu0 %v38
  %79 = vmatprep.subr.mxu0 0.0
  %80 = vmatpush1.msra.mxu0 %v53
  %81 = vmatprep.subr.mxu0 0.0
  %82 = vmatpush1.msra.mxu0 0.0
  %83 = vmatprep.subr.mxu0 0.0
  %84 = vmatpush1.msra.mxu0 0.0
  %85 = vmatprep.subr.mxu0 0.0
  %86 = vmatpush1.msra.mxu0 0.0
  %87 = vmatprep.subr.mxu0 0.0
  %88 = vmatpush1.msra.mxu0 0.0
  %89 = vmatprep.subr.mxu0 0.0
  %90 = vmatpush1.msra.mxu0 0.0
  %91 = vmatprep.subr.mxu0 0.0
  %92 = vmatpush1.msra.mxu0 0.0
  %93 = vmatprep.subr.mxu0 0.0
  %94 = vmatpush1.msra.mxu0 0.0
  %95 = vmatprep.subr.mxu0 0.0
  %96 = vmatpush1.msra.mxu0 0.0
  %97 = vmatprep.subr.mxu0 0.0
  %98 = vmatpush1.msra.mxu0 0.0
  %99 = vmatprep.subr.mxu0 0.0
  %100 = vmatpush1.msra.mxu0 0.0
  %101 = vmatprep.subr.mxu0 0.0
  %102 = vmatpush1.msra.mxu0 0.0
  %103 = vmatprep.subr.mxu0 0.0
  %104 = vmatpush1.msra.mxu0 0.0
  %105 = vmatprep.subr.mxu0 0.0
  %106 = vmatpush1.msra.mxu0 0.0
  %107 = vmatprep.subr.mxu0 0.0
  %108 = vmatpush1.msra.mxu0 0.0
  %109 = vmatprep.subr.mxu0 0.0
  %110 = vmatpush1.msra.mxu0 0.0
  %111 = vmatprep.subr.mxu0 0.0
  %112 = vmatpush1.msra.mxu0 0.0
  %113 = vmatprep.subr.mxu0 0.0
  %114 = vmatpush1.msra.mxu0 0.0
  %115 = vmatprep.subr.mxu0 0.0
  %116 = vmatpush1.msra.mxu0 0.0
  %117 = vmatprep.subr.mxu0 0.0
  %118 = vmatpush1.msra.mxu0 0.0
  %119 = vmatprep.mubr.f32.mxu0 0.0
  %120 = vmatmul.mubr.f32.gmra.mrb[0].mxu0 %v49
  %v121 = vpop.f32.mrb[0].mxu0
  %v122 = vadd.f32 %v45, %v121
  %v123 = vpop.f32.mrb[0].mxu0
  %124 = vdwg.mxu0
  %v125 = vtanh.pop %v122
  %v126 = vld [vmem:[%s3] sm:$0xff]
  %v127 = vld [vmem:[%s3 + $0x8] sm:$0xff]
  %v128 = vld [vmem:[%s3 + $0x10] sm:$0xff]
  %v129 = vld [vmem:[%s3 + $0x18] sm:$0xff]
  %v130 = vld [vmem:[%s4] sm:$0x1]
  %v132 = vlaneseq
  %v133 = vshrl.u32 %v132, 7
  %v134 = vsub.s32 0, %v133
  %v135 = vrot.slane %v130, %v134
  %vm137 = vcmask 261120
  %v139 = vsel %vm137, %v125, 0
  %141 = vmatprep.subr.mxu0 0.0
  %142 = vmatpush1.msra.mxu0 %v126
  %143 = vmatprep.subr.mxu0 0.0
  %144 = vmatpush1.msra.mxu0 %v127
  %145 = vmatprep.subr.mxu0 0.0
  %146 = vmatpush1.msra.mxu0 %v128
  %147 = vmatprep.subr.mxu0 0.0
  %148 = vmatpush1.msra.mxu0 %v129
  %149 = vmatprep.subr.mxu0 0.0
  %150 = vmatpush1.msra.mxu0 0.0
  %151 = vmatprep.subr.mxu0 0.0
  %152 = vmatpush1.msra.mxu0 0.0
  %153 = vmatprep.subr.mxu0 0.0
  %154 = vmatpush1.msra.mxu0 0.0
  %155 = vmatprep.subr.mxu0 0.0
  %156 = vmatpush1.msra.mxu0 0.0
  %157 = vmatprep.subr.mxu0 0.0
  %158 = vmatpush1.msra.mxu0 0.0
  %159 = vmatprep.subr.mxu0 0.0
  %160 = vmatpush1.msra.mxu0 0.0
  %161 = vmatprep.subr.mxu0 0.0
  %162 = vmatpush1.msra.mxu0 0.0
  %163 = vmatprep.subr.mxu0 0.0
  %164 = vmatpush1.msra.mxu0 0.0
  %165 = vmatprep.subr.mxu0 0.0
  %166 = vmatpush1.msra.mxu0 0.0
  %167 = vmatprep.subr.mxu0 0.0
  %168 = vmatpush1.msra.mxu0 0.0
  %169 = vmatprep.subr.mxu0 0.0
  %170 = vmatpush1.msra.mxu0 0.0
  %171 = vmatprep.subr.mxu0 0.0
  %172 = vmatpush1.msra.mxu0 0.0
  %173 = vmatprep.subr.mxu0 0.0
  %174 = vmatpush1.msra.mxu0 0.0
  %175 = vmatprep.subr.mxu0 0.0
  %176 = vmatpush1.msra.mxu0 0.0
  %177 = vmatprep.subr.mxu0 0.0
  %178 = vmatpush1.msra.mxu0 0.0
  %179 = vmatprep.subr.mxu0 0.0
  %180 = vmatpush1.msra.mxu0 0.0
  %181 = vmatprep.subr.mxu0 0.0
  %182 = vmatpush1.msra.mxu0 0.0
  %183 = vmatprep.subr.mxu0 0.0
  %184 = vmatpush1.msra.mxu0 0.0
  %185 = vmatprep.subr.mxu0 0.0
  %186 = vmatpush1.msra.mxu0 0.0
  %187 = vmatprep.subr.mxu0 0.0
  %188 = vmatpush1.msra.mxu0 0.0
  %189 = vmatprep.subr.mxu0 0.0
  %190 = vmatpush1.msra.mxu0 0.0
  %191 = vmatprep.subr.mxu0 0.0
  %192 = vmatpush1.msra.mxu0 0.0
  %193 = vmatprep.subr.mxu0 0.0
  %194 = vmatpush1.msra.mxu0 0.0
  %195 = vmatprep.subr.mxu0 0.0
  %196 = vmatpush1.msra.mxu0 0.0
  %197 = vmatprep.subr.mxu0 0.0
  %198 = vmatpush1.msra.mxu0 0.0
  %199 = vmatprep.subr.mxu0 0.0
  %200 = vmatpush1.msra.mxu0 0.0
  %201 = vmatprep.subr.mxu0 0.0
  %202 = vmatpush1.msra.mxu0 0.0
  %203 = vmatprep.subr.mxu0 0.0
  %204 = vmatpush1.msra.mxu0 0.0
  %205 = vmatprep.mubr.f32.mxu0 0.0
  %206 = vmatmul.mubr.f32.gmra.mrb[0].mxu0 %v139
  %v207 = vpop.f32.mrb[0].mxu0
  %v208 = vadd.f32 %v135, %v207
  %v209 = vpop.f32.mrb[0].mxu0
  %210 = vdwg.mxu0
  %v211 = vmax.f32 %v208, 0.0
  %v212 = vld [vmem:[%s5] sm:$0x3f]
  %v213 = vld [vmem:[%s6] sm:$0x3f]
  %215 = vset.pattern.permute.xlu0 0
  %216 = vperm.xlu0 %215, %v213
  %v217 = vpop.permute.xlu0 %216
  %vm219 = vcmask 130048
  %v221 = vsel %vm219, %v212, 0
  %v224 = vsel %vm219, %v211, 0
  %226 = vmatprep.subr.mxu0 0.0
  %227 = vmatpush1.xpose.msra.mxu0 %v224
  %228 = vmatprep.subr.mxu0 0.0
  %229 = vmatpush1.xpose.msra.mxu0 0.0
  %230 = vmatprep.subr.mxu0 0.0
  %231 = vmatpush1.xpose.msra.mxu0 0.0
  %232 = vmatprep.subr.mxu0 0.0
  %233 = vmatpush1.xpose.msra.mxu0 0.0
  %234 = vmatprep.subr.mxu0 0.0
  %235 = vmatpush1.xpose.msra.mxu0 0.0
  %236 = vmatprep.subr.mxu0 0.0
  %237 = vmatpush1.xpose.msra.mxu0 0.0
  %238 = vmatprep.subr.mxu0 0.0
  %239 = vmatpush1.xpose.msra.mxu0 0.0
  %240 = vmatprep.subr.mxu0 0.0
  %241 = vmatpush1.xpose.msra.mxu0 0.0
  %242 = vmatprep.subr.mxu0 0.0
  %243 = vmatpush1.xpose.msra.mxu0 0.0
  %244 = vmatprep.subr.mxu0 0.0
  %245 = vmatpush1.xpose.msra.mxu0 0.0
  %246 = vmatprep.subr.mxu0 0.0
  %247 = vmatpush1.xpose.msra.mxu0 0.0
  %248 = vmatprep.subr.mxu0 0.0
  %249 = vmatpush1.xpose.msra.mxu0 0.0
  %250 = vmatprep.subr.mxu0 0.0
  %251 = vmatpush1.xpose.msra.mxu0 0.0
  %252 = vmatprep.subr.mxu0 0.0
  %253 = vmatpush1.xpose.msra.mxu0 0.0
  %254 = vmatprep.subr.mxu0 0.0
  %255 = vmatpush1.xpose.msra.mxu0 0.0
  %256 = vmatprep.subr.mxu0 0.0
  %257 = vmatpush1.xpose.msra.mxu0 0.0
  %258 = vmatprep.subr.mxu0 0.0
  %259 = vmatpush1.xpose.msra.mxu0 0.0
  %260 = vmatprep.subr.mxu0 0.0
  %261 = vmatpush1.xpose.msra.mxu0 0.0
  %262 = vmatprep.subr.mxu0 0.0
  %263 = vmatpush1.xpose.msra.mxu0 0.0
  %264 = vmatprep.subr.mxu0 0.0
  %265 = vmatpush1.xpose.msra.mxu0 0.0
  %266 = vmatprep.subr.mxu0 0.0
  %267 = vmatpush1.xpose.msra.mxu0 0.0
  %268 = vmatprep.subr.mxu0 0.0
  %269 = vmatpush1.xpose.msra.mxu0 0.0
  %270 = vmatprep.subr.mxu0 0.0
  %271 = vmatpush1.xpose.msra.mxu0 0.0
  %272 = vmatprep.subr.mxu0 0.0
  %273 = vmatpush1.xpose.msra.mxu0 0.0
  %274 = vmatprep.subr.mxu0 0.0
  %275 = vmatpush1.xpose.msra.mxu0 0.0
  %276 = vmatprep.subr.mxu0 0.0
  %277 = vmatpush1.xpose.msra.mxu0 0.0
  %278 = vmatprep.subr.mxu0 0.0
  %279 = vmatpush1.xpose.msra.mxu0 0.0
  %280 = vmatprep.subr.mxu0 0.0
  %281 = vmatpush1.xpose.msra.mxu0 0.0
  %282 = vmatprep.subr.mxu0 0.0
  %283 = vmatpush1.xpose.msra.mxu0 0.0
  %284 = vmatprep.subr.mxu0 0.0
  %285 = vmatpush1.xpose.msra.mxu0 0.0
  %286 = vmatprep.subr.mxu0 0.0
  %287 = vmatpush1.xpose.msra.mxu0 0.0
  %288 = vmatprep.subr.mxu0 0.0
  %289 = vmatpush1.xpose.msra.mxu0 0.0
  %290 = vmatprep.mubr.f32.mxu0 0.0
  %291 = vmatmul.mubr.f32.gmra.mrb[0].mxu0 %v221
  %v292 = vpop.f32.mrb[0].mxu0
  %v293 = vadd.f32 %v217, %v292
  %v294 = vpop.f32.mrb[0].mxu0
  %295 = vdwg.mxu0
  %vm296 = vcmask 13312
  %297 = vst.msk [vmem:[%s7] sm:$0x3f] %vm296, %v293
  // Predicated region
  $region30: #{tpu_custom_call.1} parent=0 // pred_check
    _
  $region31: #{tpu_custom_call.1} parent=0 // pred_check_branch
    %299 = sbr.rel (0) target = $region33
  $region32: #{tpu_custom_call.1} parent=0 // pred_region
    _
  $region33: #{tpu_custom_call.1} parent=0 // pred_fallthru
    _
  // Predicated region
  $region34: #{tpu_custom_call.1} parent=0 // pred_check
    _
  $region35: #{tpu_custom_call.1} parent=0 // pred_check_branch
    %301 = sbr.rel (0) target = $region37
  $region36: #{tpu_custom_call.1} parent=0 // pred_region
    _
  $region37: #{tpu_custom_call.1} parent=0 // pred_fallthru
    _

</llo_original>
